<compile_context>
chip_gen: v7x
topology: tpu7x:2x2x1
jax: 0.10.0
libtpu: 0.0.40
codegen_flags: <defaults>
</compile_context>

<pallas_src>
import math
import functools

import jax
import jax.numpy as jnp
from jax.experimental import pallas as pl
from jax.experimental.pallas import tpu as pltpu


def _round_up(x, m):
    return ((x + m - 1) // m) * m


def _gat_kernel(item_ref, ent_ref, adj_ref, wa1_ref, wa2_ref, out_ref,
                *, alpha, concat):
    item = item_ref[...]                      # (TN, F_in)
    ent = ent_ref[...]                        # (TN, M, F_in)
    adj = adj_ref[...]                        # (TN, M)
    wa1 = wa1_ref[...]                        # (1, F_in)   = W @ a[:F_out]
    wa2 = wa2_ref[...]                        # (1, F_in)   = W @ a[F_out:]

    # e = LeakyReLU( cat(Wh, We) @ a ) == LeakyReLU( item@(W a1) + ent@(W a2) )
    # VPU multiply + lane (XLU) reduce -- no MXU, no (N*M, F_out) intermediate.
    s1 = jnp.sum(item * wa1, axis=-1, keepdims=True)            # (TN, 1)
    s2 = jnp.sum(ent * wa2[:, None, :], axis=-1)                 # (TN, M)
    e = s1 + s2
    e = jnp.where(e >= 0, e, alpha * e)                          # LeakyReLU

    # masked softmax over neighbors (dim=1)
    neg = jnp.float32(-9e15)
    att = jnp.where(adj > 0, e, neg)
    att = jnp.exp(att - jnp.max(att, axis=1, keepdims=True))
    denom = jnp.sum(att, axis=1, keepdims=True)                  # >= 1 always
    inv = pl.reciprocal(denom, approx=True)                      # EUP slot
    inv = inv * (2.0 - denom * inv)                              # Newton refine
    att = att * inv
    # (attention dropout is identity at inference)

    # entity_emb_weighted = bmm(attention.unsqueeze(1), entity_embs).squeeze()
    # VPU multiply + sublane reduce over M; entity_embs stays 3-D (no reshape).
    weighted = jnp.sum(att[:, :, None] * ent, axis=1)            # (TN, F_in)

    h = weighted + item
    if concat:
        # ELU(alpha=1); clamp the exp argument so the discarded branch never
        # produces inf.
        h = jnp.where(h > 0, h, jnp.exp(jnp.minimum(h, 0.0)) - 1.0)
    out_ref[...] = h.astype(out_ref.dtype)


def gat_forward(item_embs, entity_embs, adj, W, a, *,
                alpha=0.2, concat=True, block_rows=1024):
    """Pallas forward of GraphAttentionLayer.forward (inference semantics).

    block_rows: rows (items) per grid step.  ~1024 is safe on every TPU
    generation; v6e/v5e (128 MiB VMEM) can take 2048-4096 for a bit more
    HBM-roofline efficiency, v7x (64 MiB VMEM, 2 TCs) should stay <= ~2048.
    """
    N, F_in = item_embs.shape
    M = entity_embs.shape[1]
    F_out = W.shape[1]

    # Fold the attention vector into W once (kills Wh / We entirely).
    wa1 = (W @ a[:F_out]).reshape(1, F_in).astype(jnp.float32)   # (1, F_in)
    wa2 = (W @ a[F_out:]).reshape(1, F_in).astype(jnp.float32)   # (1, F_in)

    # Row tile: multiple of 8 (sublane), pad N up to a whole number of tiles.
    tn = max(8, min(int(block_rows), _round_up(N, 8)))
    tn = _round_up(tn, 8)
    n_pad = _round_up(N, tn)
    if n_pad != N:
        pad = n_pad - N
        item_embs = jnp.pad(item_embs, ((0, pad), (0, 0)))
        entity_embs = jnp.pad(entity_embs, ((0, pad), (0, 0), (0, 0)))
        adj = jnp.pad(adj, ((0, pad), (0, 0)))

    grid = (n_pad // tn,)
    kernel = functools.partial(_gat_kernel, alpha=alpha, concat=concat)

    # Scoped-VMEM estimate (double-buffered, 128-lane-padded tiles):
    #   ent: tn*4KB, item/adj/out: tn*512B each, x2 buffers, + headroom.
    est = tn * 2 * (4096 + 512 + 512 + 512) + (2 << 20)
    vmem_limit = int(min(max(2 * est, 32 << 20), 48 << 20))

    cost = pl.CostEstimate(
        flops=int(n_pad * (4 * M * F_in + 2 * F_in + 8 * M + F_in)),
        transcendentals=int(n_pad * (M + 1 + F_in)),
        bytes_accessed=int(n_pad * 4 * (2 * F_in + M * F_in + M)),
    )

    out = pl.pallas_call(
        kernel,
        out_shape=jax.ShapeDtypeStruct((n_pad, F_in), jnp.float32),
        grid=grid,
        in_specs=[
            pl.BlockSpec((tn, F_in), lambda i: (i, 0)),        # item_embs
            pl.BlockSpec((tn, M, F_in), lambda i: (i, 0, 0)),  # entity_embs
            pl.BlockSpec((tn, M), lambda i: (i, 0)),           # adj
            pl.BlockSpec((1, F_in), lambda i: (0, 0)),         # wa1 (resident)
            pl.BlockSpec((1, F_in), lambda i: (0, 0)),         # wa2 (resident)
        ],
        out_specs=pl.BlockSpec((tn, F_in), lambda i: (i, 0)),
        compiler_params=pltpu.CompilerParams(
            dimension_semantics=("parallel",),
            vmem_limit_bytes=vmem_limit,
        ),
        cost_estimate=cost,
    )(item_embs, entity_embs, adj, wa1, wa2)

    return out[:N]


if __name__ == "__main__":
    key = jax.random.PRNGKey(0)
    k1, k2, k3, k4, k5 = jax.random.split(key, 5)

    N, M = 20, 8
    F_in, F_out = 32, 16
    alpha = 0.2

    item_embs = jax.random.normal(k1, (N, F_in), dtype=jnp.float32)
    entity_embs = jax.random.normal(k2, (N, M, F_in), dtype=jnp.float32)
    adj = (jax.random.uniform(k3, (N, M)) > 0.3).astype(jnp.float32)

    # Deterministic xavier_uniform_ (gain=1.414) as in the module __init__.
    bw = 1.414 * math.sqrt(6.0 / (F_in + F_out))
    W = jax.random.uniform(k4, (F_in, F_out), minval=-bw, maxval=bw,
                           dtype=jnp.float32)
    ba = 1.414 * math.sqrt(6.0 / (2 * F_out + 1))
    a = jax.random.uniform(k5, (2 * F_out, 1), minval=-ba, maxval=ba,
                           dtype=jnp.float32)

    # block_rows=8 -> 3 grid steps + a padded tail block, exercising the
    # tiled/pipelined path even at this toy size.
    out = jax.block_until_ready(
        gat_forward(item_embs, entity_embs, adj, W, a,
                    alpha=alpha, concat=True, block_rows=8))

    # Pure-JAX reference of the exact PyTorch forward (inference).
    Wh = item_embs @ W
    We = jnp.einsum('nmf,fo->nmo', entity_embs, W)
    a_input = jnp.concatenate(
        [jnp.broadcast_to(Wh[:, None, :], We.shape), We], axis=-1)
    e = (a_input @ a)[..., 0]
    e = jnp.where(e >= 0, e, alpha * e)
    att = jnp.where(adj > 0, e, jnp.float32(-9e15))
    att = jax.nn.softmax(att, axis=1)
    ref = jnp.einsum('nm,nmf->nf', att, entity_embs) + item_embs
    ref = jnp.where(ref > 0, ref, jnp.exp(ref) - 1.0)
    assert out.shape == ref.shape
    assert jnp.allclose(out, ref, rtol=1e-4, atol=1e-4), "mismatch vs reference"

    print("KERNEL_OK")
</pallas_src>

<mosaic_0001>
module attributes {stable_mosaic.version = 11 : i64} {
  func.func @_gat_kernel(%arg0: i32, %arg1: memref<8x32xf32, #tpu.memory_space<vmem>>, %arg2: memref<8x8x32xf32, #tpu.memory_space<vmem>>, %arg3: memref<8x8xf32, #tpu.memory_space<vmem>>, %arg4: memref<1x32xf32, #tpu.memory_space<vmem>>, %arg5: memref<1x32xf32, #tpu.memory_space<vmem>>, %arg6: memref<8x32xf32, #tpu.memory_space<vmem>>) attributes {dimension_semantics = [#tpu.dimension_semantics<parallel>], iteration_bounds = array<i64: 3>, scalar_prefetch = 0 : i64, scratch_operands = 0 : i64, tpu.core_type = #tpu.core_type<tc>, window_params = [{transform_indices = @transform_0, window_bounds = array<i64: 8, 32>}, {transform_indices = @transform_1, window_bounds = array<i64: 8, 8, 32>}, {transform_indices = @transform_2, window_bounds = array<i64: 8, 8>}, {pipeline_mode = #tpu.pipeline_mode<synchronous>, transform_indices = @transform_3, window_bounds = array<i64: 1, 32>}, {pipeline_mode = #tpu.pipeline_mode<synchronous>, transform_indices = @transform_4, window_bounds = array<i64: 1, 32>}, {transform_indices = @transform_5, window_bounds = array<i64: 8, 32>}]} {
    %c0 = arith.constant 0 : index
    %c0_0 = arith.constant 0 : index
    %0 = vector.load %arg1[%c0, %c0_0] : memref<8x32xf32, #tpu.memory_space<vmem>>, vector<8x32xf32>
    %c0_1 = arith.constant 0 : index
    %c0_2 = arith.constant 0 : index
    %c0_3 = arith.constant 0 : index
    %1 = vector.load %arg2[%c0_1, %c0_2, %c0_3] : memref<8x8x32xf32, #tpu.memory_space<vmem>>, vector<8x8x32xf32>
    %c0_4 = arith.constant 0 : index
    %c0_5 = arith.constant 0 : index
    %2 = vector.load %arg3[%c0_4, %c0_5] : memref<8x8xf32, #tpu.memory_space<vmem>>, vector<8x8xf32>
    %c0_6 = arith.constant 0 : index
    %c0_7 = arith.constant 0 : index
    %3 = vector.load %arg4[%c0_6, %c0_7] : memref<1x32xf32, #tpu.memory_space<vmem>>, vector<1x32xf32>
    %c0_8 = arith.constant 0 : index
    %c0_9 = arith.constant 0 : index
    %4 = vector.load %arg5[%c0_8, %c0_9] : memref<1x32xf32, #tpu.memory_space<vmem>>, vector<1x32xf32>
    %5 = vector.broadcast %3 : vector<1x32xf32> to vector<8x32xf32>
    %6 = arith.mulf %0, %5 : vector<8x32xf32>
    %cst = arith.constant dense<0.000000e+00> : vector<8xf32>
    %7 = vector.multi_reduction <add>, %6, %cst [1] : vector<8x32xf32> to vector<8xf32>
    %8 = vector.shape_cast %7 : vector<8xf32> to vector<8x1xf32>
    %9 = vector.shape_cast %4 : vector<1x32xf32> to vector<1x1x32xf32>
    %10 = vector.broadcast %9 : vector<1x1x32xf32> to vector<8x8x32xf32>
    %11 = arith.mulf %1, %10 : vector<8x8x32xf32>
    %cst_10 = arith.constant dense<0.000000e+00> : vector<8x8xf32>
    %12 = vector.multi_reduction <add>, %11, %cst_10 [2] : vector<8x8x32xf32> to vector<8x8xf32>
    %13 = vector.broadcast %8 : vector<8x1xf32> to vector<8x8xf32>
    %14 = arith.addf %13, %12 : vector<8x8xf32>
    %cst_11 = arith.constant 0.000000e+00 : f32
    %15 = vector.broadcast %cst_11 : f32 to vector<8x8xf32>
    %16 = arith.cmpf oge, %14, %15 : vector<8x8xf32>
    %cst_12 = arith.constant 2.000000e-01 : f32
    %17 = vector.broadcast %cst_12 : f32 to vector<8x8xf32>
    %18 = arith.mulf %17, %14 : vector<8x8xf32>
    %19 = arith.select %16, %14, %18 : vector<8x8xi1>, vector<8x8xf32>
    %cst_13 = arith.constant 0.000000e+00 : f32
    %20 = vector.broadcast %cst_13 : f32 to vector<8x8xf32>
    %21 = arith.cmpf ogt, %2, %20 : vector<8x8xf32>
    %cst_14 = arith.constant -9.000000e+15 : f32
    %22 = vector.broadcast %cst_14 : f32 to vector<8x8xf32>
    %23 = arith.select %21, %19, %22 : vector<8x8xi1>, vector<8x8xf32>
    %cst_15 = arith.constant dense<0xFF800000> : vector<8xf32>
    %24 = vector.multi_reduction <maximumf>, %23, %cst_15 [1] : vector<8x8xf32> to vector<8xf32>
    %25 = vector.shape_cast %24 : vector<8xf32> to vector<8x1xf32>
    %26 = vector.broadcast %25 : vector<8x1xf32> to vector<8x8xf32>
    %27 = arith.subf %23, %26 : vector<8x8xf32>
    %28 = math.exp %27 : vector<8x8xf32>
    %cst_16 = arith.constant dense<0.000000e+00> : vector<8xf32>
    %29 = vector.multi_reduction <add>, %28, %cst_16 [1] : vector<8x8xf32> to vector<8xf32>
    %30 = vector.shape_cast %29 : vector<8xf32> to vector<8x1xf32>
    %31 = tpu.reciprocal %30 {approx = true} : vector<8x1xf32> -> vector<8x1xf32>
    %32 = arith.mulf %30, %31 : vector<8x1xf32>
    %cst_17 = arith.constant 2.000000e+00 : f32
    %33 = vector.broadcast %cst_17 : f32 to vector<8x1xf32>
    %34 = arith.subf %33, %32 : vector<8x1xf32>
    %35 = arith.mulf %31, %34 : vector<8x1xf32>
    %36 = vector.broadcast %35 : vector<8x1xf32> to vector<8x8xf32>
    %37 = arith.mulf %28, %36 : vector<8x8xf32>
    %38 = vector.shape_cast %37 : vector<8x8xf32> to vector<8x8x1xf32>
    %39 = vector.broadcast %38 : vector<8x8x1xf32> to vector<8x8x32xf32>
    %40 = arith.mulf %39, %1 : vector<8x8x32xf32>
    %cst_18 = arith.constant dense<0.000000e+00> : vector<8x32xf32>
    %41 = vector.multi_reduction <add>, %40, %cst_18 [1] : vector<8x8x32xf32> to vector<8x32xf32>
    %42 = arith.addf %41, %0 : vector<8x32xf32>
    %cst_19 = arith.constant 0.000000e+00 : f32
    %43 = vector.broadcast %cst_19 : f32 to vector<8x32xf32>
    %44 = arith.cmpf ogt, %42, %43 : vector<8x32xf32>
    %cst_20 = arith.constant 0.000000e+00 : f32
    %45 = vector.broadcast %cst_20 : f32 to vector<8x32xf32>
    %46 = arith.minimumf %42, %45 : vector<8x32xf32>
    %47 = math.exp %46 : vector<8x32xf32>
    %cst_21 = arith.constant 1.000000e+00 : f32
    %48 = vector.broadcast %cst_21 : f32 to vector<8x32xf32>
    %49 = arith.subf %47, %48 : vector<8x32xf32>
    %50 = arith.select %44, %42, %49 : vector<8x32xi1>, vector<8x32xf32>
    %c0_22 = arith.constant 0 : index
    %c0_23 = arith.constant 0 : index
    %51 = vector.load %arg6[%c0_22, %c0_23] : memref<8x32xf32, #tpu.memory_space<vmem>>, vector<8x32xf32>
    tpu.vector_store %arg6[%c0_22, %c0_23], %50 {strides = array<i32>} : memref<8x32xf32, #tpu.memory_space<vmem>>, vector<8x32xf32>,
    return
  }
  func.func @transform_0(%arg0: i32) -> (i32, i32) {
    %c0_i32 = arith.constant 0 : i32
    %c0_i32_0 = arith.constant 0 : i32
    return %arg0, %c0_i32 : i32, i32
  }
  func.func @transform_1(%arg0: i32) -> (i32, i32, i32) {
    %c0_i32 = arith.constant 0 : i32
    %c0_i32_0 = arith.constant 0 : i32
    %c0_i32_1 = arith.constant 0 : i32
    return %arg0, %c0_i32, %c0_i32_0 : i32, i32, i32
  }
  func.func @transform_2(%arg0: i32) -> (i32, i32) {
    %c0_i32 = arith.constant 0 : i32
    %c0_i32_0 = arith.constant 0 : i32
    return %arg0, %c0_i32 : i32, i32
  }
  func.func @transform_3(%arg0: i32) -> (i32, i32) {
    %c0_i32 = arith.constant 0 : i32
    %c0_i32_0 = arith.constant 0 : i32
    %c0_i32_1 = arith.constant 0 : i32
    return %c0_i32, %c0_i32_0 : i32, i32
  }
  func.func @transform_4(%arg0: i32) -> (i32, i32) {
    %c0_i32 = arith.constant 0 : i32
    %c0_i32_0 = arith.constant 0 : i32
    %c0_i32_1 = arith.constant 0 : i32
    return %c0_i32, %c0_i32_0 : i32, i32
  }
  func.func @transform_5(%arg0: i32) -> (i32, i32) {
    %c0_i32 = arith.constant 0 : i32
    %c0_i32_0 = arith.constant 0 : i32
    return %arg0, %c0_i32 : i32, i32
  }
}

</mosaic_0001>

<llo_original>
// kernel: tpu_custom_call.1
$region0: #{tpu_custom_call.1}
  #allocation0 [shape = 'u32[]', space=smem, size = 0x4, offset = 0x4, fixed_abs, tag = 'smem constant byte address 0x4 - core index']
  #allocation1 [shape = 'u32[144,128]{1,0:T(1,128)}', space=vmem, size = 0x12000, scoped, tag = 'internal scratch']
  %s0 = inlined_call_operand.vmem [shape: f32[24,32], index: 0, kind: input, shape index: {}]
  %s1 = inlined_call_operand.hbm [shape: f32[24,8,32], index: 1, kind: input, shape index: {}]
  %s2 = inlined_call_operand.vmem [shape: f32[24,8], index: 2, kind: input, shape index: {}]
  %s3 = inlined_call_operand.vmem [shape: f32[1,32], index: 3, kind: input, shape index: {}]
  %s4 = inlined_call_operand.vmem [shape: f32[1,32], index: 4, kind: input, shape index: {}]
  %s5 = inlined_call_operand.hbm [shape: f32[24,32], index: 5, kind: output, shape index: {}]
  %s6 = sld [smem:[#allocation0]]
  $region57: #{tpu_custom_call.1} parent=0
    _
  %s8 = ssub.s32 1, %s6
  %s9 = scalar_select 0, %s8, %s6
  $region1: #{tpu_custom_call.1} parent=0
    #allocation2 [shape = 'u8[65536]{0}', space=vmem, size = 0x10000, scoped, tag = 'input window, operand 1']
    #allocation3 [shape = 's32[2]{0}', space=sflag, size = 0x8, scoped, tag = 'scoped memory for tpu_custom_call.1']
    #allocation4 [shape = 's32[2]{0}', space=sflag, size = 0x8, scoped, tag = 'scoped memory for tpu_custom_call.1']
    #allocation5 [shape = 'u8[8192]{0}', space=vmem, size = 0x2000, scoped, tag = 'output window, operand 0']
    %10 = vsyncpa [#allocation3], 0
    %s11 = scalar_lea.sflag [#allocation3], 1
    %12 = vsyncpa %s11, 0
    %13 = vsyncpa [#allocation4], 0
    %s14 = scalar_lea.sflag [#allocation4], 1
    %15 = vsyncpa %s14, 0
    loop: start=0, step=1, limit=5
    $region2: #{tpu_custom_call.1} parent=1 // loop_pre_header
      _
    $region3: #{tpu_custom_call.1} parent=1 // loop_header
      %s17 = sphi 0, %s21
      %p18 = scmp.ge.s32.totalorder %s17, 5
      %s27 = sphi 0, %s29
      %s30 = sphi 0, %s27
      %s31 = sphi 0, %s30
      %s47 = sphi 0, %s31
      %s53 = sphi 0, %s55
      %s56 = sphi 0, %s53
      %s57 = sphi 0, %s56
      %s73 = sphi 0, %s57
      %s79 = sphi 0, %s81
      %s82 = sphi 0, %s79
      %s83 = sphi 0, %s82
      %s99 = sphi 0, %s83
      %s103 = sphi 0, %s103
      %s105 = sphi 0, %s103
      %s106 = sphi 0, %s105
      %s120 = sphi 0, %s106
      %s124 = sphi 0, %s124
      %s126 = sphi 0, %s124
      %s127 = sphi 0, %s126
      %s141 = sphi 0, %s127
      %s147 = sphi 0, %s149
      %s150 = sphi 0, %s147
      %s151 = sphi 0, %s150
      %s167 = sphi 0, %s151
    $region4: #{tpu_custom_call.1} parent=1 // loop_header_branch
      %20 = sbr.rel (%p18) target = $region8
    $region5: #{tpu_custom_call.1} parent=1 // loop_body
      %s22 = ssub.s32 %s17, 1
      %s23 = ssub.s32 %s17, 2
      %s24 = sadd.s32 %s17, 1
      %s25 = ssub.s32 %s17, %s24
      %p26 = scmp.eq.s32.totalorder %s25, 0
      %s28 = sadd.s32 %s27, 1
      %s29 = scalar_select %p26, %s27, %s28
      %p32 = pneg %p26
      %p33 = scmp.eq.s32.totalorder %s17, 2
      %p34 = por %p32, %p33
      %p35 = scmp.ne.s32.totalorder %s27, %s30
      %p36 = scmp.eq.s32.totalorder %s17, 0
      %p37 = por %p35, %p36
      %p38 = scmp.ne.s32.totalorder %s27, %s30
      %p39 = scmp.eq.s32.totalorder %s22, 2
      %p40 = por %p38, %p39
      %p41 = scmp.ne.s32.totalorder %s30, %s31
      %p42 = scmp.eq.s32.totalorder %s22, 0
      %p43 = por %p41, %p42
      %p44 = scmp.ne.s32.totalorder %s30, %s31
      %p45 = scmp.eq.s32.totalorder %s23, 2
      %p46 = por %p44, %p45
      %p48 = scmp.ne.s32.totalorder %s31, %s47
      %p49 = scmp.eq.s32.totalorder %s23, 0
      %p50 = por %p48, %p49
      %s51 = ssub.s32 %s17, %s24
      %p52 = scmp.eq.s32.totalorder %s51, 0
      %s54 = sadd.s32 %s53, 1
      %s55 = scalar_select %p52, %s53, %s54
      %p58 = pneg %p52
      %p59 = scmp.eq.s32.totalorder %s17, 2
      %p60 = por %p58, %p59
      %p61 = scmp.ne.s32.totalorder %s53, %s56
      %p62 = scmp.eq.s32.totalorder %s17, 0
      %p63 = por %p61, %p62
      %p64 = scmp.ne.s32.totalorder %s53, %s56
      %p65 = scmp.eq.s32.totalorder %s22, 2
      %p66 = por %p64, %p65
      %p67 = scmp.ne.s32.totalorder %s56, %s57
      %p68 = scmp.eq.s32.totalorder %s22, 0
      %p69 = por %p67, %p68
      %p70 = scmp.ne.s32.totalorder %s56, %s57
      %p71 = scmp.eq.s32.totalorder %s23, 2
      %p72 = por %p70, %p71
      %p74 = scmp.ne.s32.totalorder %s57, %s73
      %p75 = scmp.eq.s32.totalorder %s23, 0
      %p76 = por %p74, %p75
      %s77 = ssub.s32 %s17, %s24
      %p78 = scmp.eq.s32.totalorder %s77, 0
      %s80 = sadd.s32 %s79, 1
      %s81 = scalar_select %p78, %s79, %s80
      %p84 = pneg %p78
      %p85 = scmp.eq.s32.totalorder %s17, 2
      %p86 = por %p84, %p85
      %p87 = scmp.ne.s32.totalorder %s79, %s82
      %p88 = scmp.eq.s32.totalorder %s17, 0
      %p89 = por %p87, %p88
      %p90 = scmp.ne.s32.totalorder %s79, %s82
      %p91 = scmp.eq.s32.totalorder %s22, 2
      %p92 = por %p90, %p91
      %p93 = scmp.ne.s32.totalorder %s82, %s83
      %p94 = scmp.eq.s32.totalorder %s22, 0
      %p95 = por %p93, %p94
      %p96 = scmp.ne.s32.totalorder %s82, %s83
      %p97 = scmp.eq.s32.totalorder %s23, 2
      %p98 = por %p96, %p97
      %p100 = scmp.ne.s32.totalorder %s83, %s99
      %p101 = scmp.eq.s32.totalorder %s23, 0
      %p102 = por %p100, %p101
      %s104 = sadd.s32 %s103, 1
      %p107 = scmp.eq.s32.totalorder %s17, 2
      %p108 = scmp.ne.s32.totalorder %s103, %s105
      %p109 = scmp.eq.s32.totalorder %s17, 0
      %p110 = por %p108, %p109
      %p111 = scmp.ne.s32.totalorder %s103, %s105
      %p112 = scmp.eq.s32.totalorder %s22, 2
      %p113 = por %p111, %p112
      %p114 = scmp.ne.s32.totalorder %s105, %s106
      %p115 = scmp.eq.s32.totalorder %s22, 0
      %p116 = por %p114, %p115
      %p117 = scmp.ne.s32.totalorder %s105, %s106
      %p118 = scmp.eq.s32.totalorder %s23, 2
      %p119 = por %p117, %p118
      %p121 = scmp.ne.s32.totalorder %s106, %s120
      %p122 = scmp.eq.s32.totalorder %s23, 0
      %p123 = por %p121, %p122
      %s125 = sadd.s32 %s124, 1
      %p128 = scmp.eq.s32.totalorder %s17, 2
      %p129 = scmp.ne.s32.totalorder %s124, %s126
      %p130 = scmp.eq.s32.totalorder %s17, 0
      %p131 = por %p129, %p130
      %p132 = scmp.ne.s32.totalorder %s124, %s126
      %p133 = scmp.eq.s32.totalorder %s22, 2
      %p134 = por %p132, %p133
      %p135 = scmp.ne.s32.totalorder %s126, %s127
      %p136 = scmp.eq.s32.totalorder %s22, 0
      %p137 = por %p135, %p136
      %p138 = scmp.ne.s32.totalorder %s126, %s127
      %p139 = scmp.eq.s32.totalorder %s23, 2
      %p140 = por %p138, %p139
      %p142 = scmp.ne.s32.totalorder %s127, %s141
      %p143 = scmp.eq.s32.totalorder %s23, 0
      %p144 = por %p142, %p143
      %s145 = ssub.s32 %s17, %s24
      %p146 = scmp.eq.s32.totalorder %s145, 0
      %s148 = sadd.s32 %s147, 1
      %s149 = scalar_select %p146, %s147, %s148
      %p152 = pneg %p146
      %p153 = scmp.eq.s32.totalorder %s17, 2
      %p154 = por %p152, %p153
      %p155 = scmp.ne.s32.totalorder %s147, %s150
      %p156 = scmp.eq.s32.totalorder %s17, 0
      %p157 = por %p155, %p156
      %p158 = scmp.ne.s32.totalorder %s147, %s150
      %p159 = scmp.eq.s32.totalorder %s22, 2
      %p160 = por %p158, %p159
      %p161 = scmp.ne.s32.totalorder %s150, %s151
      %p162 = scmp.eq.s32.totalorder %s22, 0
      %p163 = por %p161, %p162
      %p164 = scmp.ne.s32.totalorder %s150, %s151
      %p165 = scmp.eq.s32.totalorder %s23, 2
      %p166 = por %p164, %p165
      %p168 = scmp.ne.s32.totalorder %s151, %s167
      %p169 = scmp.eq.s32.totalorder %s23, 0
      %p170 = por %p168, %p169
      %p171 = scmp.le.s32.totalorder 1, %s17
      %p172 = scmp.lt.s32.totalorder %s17, 4
      %p173 = pnand %p171, %p172
      %p174 = pneg %p173
      // Predicated region
      $region9: #{tpu_custom_call.1} parent=5 // pred_check
        _
      $region10: #{tpu_custom_call.1} parent=5 // pred_check_branch
        %176 = sbr.rel (%p173) target = $region12
      $region11: #{tpu_custom_call.1} parent=5 // pred_region
        %s177 = ssub.s32 %s17, 1
        // Predicated region
        $region13: #{tpu_custom_call.1} parent=11 // pred_check
          %p178 = pneg %p116
        $region14: #{tpu_custom_call.1} parent=11 // pred_check_branch
          %180 = sbr.rel (%p178) target = $region16
        $region15: #{tpu_custom_call.1} parent=11 // pred_region
          _
        $region16: #{tpu_custom_call.1} parent=11 // pred_fallthru
          _
        // Predicated region
        $region17: #{tpu_custom_call.1} parent=11 // pred_check
          %p181 = pneg %p137
        $region18: #{tpu_custom_call.1} parent=11 // pred_check_branch
          %183 = sbr.rel (%p181) target = $region20
        $region19: #{tpu_custom_call.1} parent=11 // pred_region
          _
        $region20: #{tpu_custom_call.1} parent=11 // pred_fallthru
          _
      $region12: #{tpu_custom_call.1} parent=5 // pred_fallthru
        _
      %p184 = scmp.lt.s32.totalorder %s17, 3
      // Predicated region
      $region21: #{tpu_custom_call.1} parent=5 // pred_check
        %p185 = pneg %p184
      $region22: #{tpu_custom_call.1} parent=5 // pred_check_branch
        %187 = sbr.rel (%p185) target = $region24
      $region23: #{tpu_custom_call.1} parent=5 // pred_region
        // Predicated region
        $region25: #{tpu_custom_call.1} parent=23 // pred_check
          %p188 = pneg %p37
        $region26: #{tpu_custom_call.1} parent=23 // pred_check_branch
          %190 = sbr.rel (%p188) target = $region28
        $region27: #{tpu_custom_call.1} parent=23 // pred_region
          %p191 = scmp.lt.s32.totalorder %s17, 2
          %s192 = scalar_select %p191, %s17, 2
          %s193 = smul.addr %s192, 8
          %s194 = scalar_lea.vmem %s0, %s193
        $region28: #{tpu_custom_call.1} parent=23 // pred_fallthru
          _
        // Predicated region
        $region29: #{tpu_custom_call.1} parent=23 // pred_check
          %p195 = pneg %p63
        $region30: #{tpu_custom_call.1} parent=23 // pred_check_branch
          %197 = sbr.rel (%p195) target = $region32
        $region31: #{tpu_custom_call.1} parent=23 // pred_region
          %s198 = sand.u32 %s53, 1
          %s199 = scalar_lea.sflag [#allocation3], %s198
          %s200 = sand.u32 %s53, 1
          %s201 = smul.addr %s200, 64
          %s202 = scalar_lea.vmem [#allocation2], %s201
          %s203 = smul.u32 8, %s17
          %s205 = ssub.s32 1024, 1024
          %206 = vsyncadd %s199, %s205
          %s207 = smul.addr %s203, 128
          %s208 = scalar_lea.hbm %s1, %s207
          %s209 = sshll.u32 %s202, 4
          %s210 = int_to_ptr.vmem [resolvable:$true] %s209
          %215 = dma.hbm_to_vmem [thread:$0]  %s208, 1024, %s210, %s199, 128, 128, 8
        $region32: #{tpu_custom_call.1} parent=23 // pred_fallthru
          _
        // Predicated region
        $region33: #{tpu_custom_call.1} parent=23 // pred_check
          %p216 = pneg %p89
        $region34: #{tpu_custom_call.1} parent=23 // pred_check_branch
          %218 = sbr.rel (%p216) target = $region36
        $region35: #{tpu_custom_call.1} parent=23 // pred_region
          %p219 = scmp.lt.s32.totalorder %s17, 2
          %s220 = scalar_select %p219, %s17, 2
          %s221 = smul.addr %s220, 8
          %s222 = scalar_lea.vmem %s2, %s221
        $region36: #{tpu_custom_call.1} parent=23 // pred_fallthru
          _
      $region24: #{tpu_custom_call.1} parent=5 // pred_fallthru
        _
      %p223 = scmp.le.s32.totalorder 1, %s17
      %p224 = scmp.lt.s32.totalorder %s17, 4
      %p225 = pnand %p223, %p224
      %p226 = pneg %p225
      // Predicated region
      $region37: #{tpu_custom_call.1} parent=5 // pred_check
        _
      $region38: #{tpu_custom_call.1} parent=5 // pred_check_branch
        %228 = sbr.rel (%p225) target = $region40
      $region39: #{tpu_custom_call.1} parent=5 // pred_region
        %s229 = ssub.s32 %s17, 1
        %s230 = sand.u32 %s56, 1
        %s231 = scalar_lea.sflag [#allocation3], %s230
        %s232 = sand.u32 %s56, 1
        %s233 = smul.addr %s232, 64
        %s234 = scalar_lea.vmem [#allocation2], %s233
        // Predicated region
        $region41: #{tpu_custom_call.1} parent=39 // pred_check
          %p235 = pneg %p69
        $region42: #{tpu_custom_call.1} parent=39 // pred_check_branch
          %237 = sbr.rel (%p235) target = $region44
        $region43: #{tpu_custom_call.1} parent=39 // pred_region
          %238 = dma.done %s231, 1024
        $region44: #{tpu_custom_call.1} parent=39 // pred_fallthru
          _
        %p239 = scmp.lt.s32.totalorder %s22, 2
        %s240 = scalar_select %p239, %s22, 2
        %s241 = smul.addr %s240, 8
        %s242 = scalar_lea.vmem %s0, %s241
        %p243 = pneg %p43
        %p244 = pneg %p40
        %s245 = sand.u32 %s56, 1
        %s246 = scalar_lea.sflag [#allocation3], %s245
        %s247 = sand.u32 %s56, 1
        %s248 = smul.addr %s247, 64
        %s249 = scalar_lea.vmem [#allocation2], %s248
        %p250 = pneg %p69
        %p251 = pneg %p66
        %p252 = scmp.lt.s32.totalorder %s22, 2
        %s253 = scalar_select %p252, %s22, 2
        %s254 = smul.addr %s253, 8
        %s255 = scalar_lea.vmem %s2, %s254
        %p256 = pneg %p95
        %p257 = pneg %p92
        %p258 = pneg %p116
        %p259 = pneg %p113
        %p260 = pneg %p137
        %p261 = pneg %p134
        %p262 = pneg %p163
        %p263 = pneg %p160
        %s264 = sand.u32 %s150, 1
        %s265 = scalar_lea.sflag [#allocation4], %s264
        %s266 = sand.u32 %s150, 1
        %s267 = smul.addr %s266, 8
        %s268 = scalar_lea.vmem [#allocation5], %s267
        %p269 = scmp.lt.s32.totalorder %s22, 2
        %s270 = scalar_select %p269, %s22, 2
        %s271 = smul.addr %s270, 8
        %s272 = scalar_lea.vmem %s0, %s271
        %s273 = smul.u32 8, %s22
        %p274 = scmp.lt.s32.totalorder %s22, 2
        %s275 = scalar_select %p274, %s22, 2
        %s276 = smul.addr %s275, 8
        %s277 = scalar_lea.vmem %s2, %s276
        %v278 = vld [vmem:[%s272] sm:$0xff]
        %v279 = vld [vmem:[%s234] sm:$0xff]
        %v280 = vld [vmem:[%s234 + $0x8] sm:$0xff]
        %v281 = vld [vmem:[%s234 + $0x10] sm:$0xff]
        %v282 = vld [vmem:[%s234 + $0x18] sm:$0xff]
        %v283 = vld [vmem:[%s234 + $0x20] sm:$0xff]
        %v284 = vld [vmem:[%s234 + $0x28] sm:$0xff]
        %v285 = vld [vmem:[%s234 + $0x30] sm:$0xff]
        %v286 = vld [vmem:[%s234 + $0x38] sm:$0xff]
        %v287 = vld [vmem:[%s277] sm:$0xff]
        %v288 = vld [vmem:[%s3] sm:$0x1]
        %v289 = vld [vmem:[%s4] sm:$0x1]
        %v291 = vlaneseq
        %v292 = vshrl.u32 %v291, 7
        %v293 = vsub.s32 0, %v292
        %v294 = vrot.slane %v288, %v293
        %v296 = vmul.f32 %v278, %v294
        %vm297 = vcmask 261120
        %v298 = vsel %vm297, %v296, 0.0
        %299 = vadd.xlane.f32.xlu0 %v298
        %v300 = vpop.xlane.xlu0 %299
        %v302 = vlaneseq
        %v303 = vshrl.u32 %v302, 7
        %v304 = vsub.s32 0, %v303
        %v305 = vrot.slane %v289, %v304
        %v307 = vmul.f32 %v279, %v305
        %v308 = vmul.f32 %v280, %v305
        %v309 = vmul.f32 %v281, %v305
        %v310 = vmul.f32 %v282, %v305
        %v311 = vmul.f32 %v283, %v305
        %v312 = vmul.f32 %v284, %v305
        %v313 = vmul.f32 %v285, %v305
        %v314 = vmul.f32 %v286, %v305
        %v315 = vsel %vm297, %v307, 0.0
        %316 = vadd.xlane.f32.xlu0 %v315
        %v317 = vpop.xlane.xlu0 %316
        %v318 = vsel %vm297, %v308, 0.0
        %319 = vadd.xlane.f32.xlu0 %v318
        %v320 = vpop.xlane.xlu0 %319
        %v321 = vsel %vm297, %v309, 0.0
        %322 = vadd.xlane.f32.xlu0 %v321
        %v323 = vpop.xlane.xlu0 %322
        %v324 = vsel %vm297, %v310, 0.0
        %325 = vadd.xlane.f32.xlu0 %v324
        %v326 = vpop.xlane.xlu0 %325
        %v327 = vsel %vm297, %v311, 0.0
        %328 = vadd.xlane.f32.xlu0 %v327
        %v329 = vpop.xlane.xlu0 %328
        %v330 = vsel %vm297, %v312, 0.0
        %331 = vadd.xlane.f32.xlu0 %v330
        %v332 = vpop.xlane.xlu0 %331
        %v333 = vsel %vm297, %v313, 0.0
        %334 = vadd.xlane.f32.xlu0 %v333
        %v335 = vpop.xlane.xlu0 %334
        %v336 = vsel %vm297, %v314, 0.0
        %337 = vadd.xlane.f32.xlu0 %v336
        %v338 = vpop.xlane.xlu0 %337
        %v347 = vlaneseq
        %v348 = vand.u32 %v347, 127
        %v349 = vlaneseq
        %v350 = vshrl.u32 %v349, 7
        %v351 = vsub.s32 %v348, %v350
        %v352 = vrot.slane %v317, %v351
        %v353 = vlaneseq
        %v354 = vshrl.u32 %v353, 7
        %v355 = vsub.s32 %v348, %v354
        %v356 = vrot.slane %v320, %v355
        %v357 = vlaneseq
        %v358 = vshrl.u32 %v357, 7
        %v359 = vsub.s32 %v348, %v358
        %v360 = vrot.slane %v323, %v359
        %v361 = vlaneseq
        %v362 = vshrl.u32 %v361, 7
        %v363 = vsub.s32 %v348, %v362
        %v364 = vrot.slane %v326, %v363
        %v365 = vlaneseq
        %v366 = vshrl.u32 %v365, 7
        %v367 = vsub.s32 %v348, %v366
        %v368 = vrot.slane %v329, %v367
        %v369 = vlaneseq
        %v370 = vshrl.u32 %v369, 7
        %v371 = vsub.s32 %v348, %v370
        %v372 = vrot.slane %v332, %v371
        %v373 = vlaneseq
        %v374 = vshrl.u32 %v373, 7
        %v375 = vsub.s32 %v348, %v374
        %v376 = vrot.slane %v335, %v375
        %v377 = vlaneseq
        %v378 = vshrl.u32 %v377, 7
        %v379 = vsub.s32 %v348, %v378
        %v380 = vrot.slane %v338, %v379
        %vm381 = vcmask 1041409
        %v382 = vsel %vm381, %v356, %v352
        %vm383 = vcmask 1042434
        %v384 = vsel %vm383, %v360, %v382
        %vm385 = vcmask 1043459
        %v386 = vsel %vm385, %v364, %v384
        %vm387 = vcmask 1044484
        %v388 = vsel %vm387, %v368, %v386
        %vm389 = vcmask 1045509
        %v390 = vsel %vm389, %v372, %v388
        %vm391 = vcmask 1046534
        %v392 = vsel %vm391, %v376, %v390
        %vm393 = vcmask 1047559
        %v394 = vsel %vm393, %v380, %v392
        %v396 = vadd.f32 %v300, %v394
        %vm397 = vcmp.ge.f32.partialorder %v396, 0.0
        %v398 = vmul.f32 %v396, 0.2
        %v399 = vsel %vm397, %v396, %v398
        %vm400 = vcmp.gt.f32.partialorder %v287, 0.0
        %v401 = vsel %vm400, %v399, -9e+15
        %vm402 = vcmask 64512
        %v403 = vsel %vm402, %v401, -inf
        %404 = vmax.xlane.f32.xlu0 %v403
        %v405 = vpop.xlane.xlu0 %404
        %v406 = vsub.f32 %v401, %v405
        %v407 = vmul.f32 %v406, 1.442695
        %v408 = vpow.pop %v407
        %v409 = vsel %vm402, %v408, 0.0
        %410 = vadd.xlane.f32.xlu0 %v409
        %v411 = vpop.xlane.xlu0 %410
        %v412 = vrcp.pop %v411
        %v413 = vmul.f32 %v411, %v412
        %v414 = vsub.f32 2.0, %v413
        %v415 = vmul.f32 %v412, %v414
        %v416 = vmul.f32 %v408, %v415
        %v417 = vlaneseq
        %v418 = vshrl.u32 %v417, 7
        %v419 = vsub.s32 0, %v418
        %v420 = vrot.slane %v416, %v419
        %422 = vbcast.lane.b32.xlu0 %v420, 256
        %v423 = vpop.permute.xlu0 %422
        %v424 = vlaneseq
        %v425 = vshrl.u32 %v424, 7
        %v426 = vsub.s32 1, %v425
        %v427 = vrot.slane %v416, %v426
        %429 = vbcast.lane.b32.xlu0 %v427, 256
        %v430 = vpop.permute.xlu0 %429
        %v431 = vlaneseq
        %v432 = vshrl.u32 %v431, 7
        %v433 = vsub.s32 2, %v432
        %v434 = vrot.slane %v416, %v433
        %436 = vbcast.lane.b32.xlu0 %v434, 256
        %v437 = vpop.permute.xlu0 %436
        %v438 = vlaneseq
        %v439 = vshrl.u32 %v438, 7
        %v440 = vsub.s32 3, %v439
        %v441 = vrot.slane %v416, %v440
        %443 = vbcast.lane.b32.xlu0 %v441, 256
        %v444 = vpop.permute.xlu0 %443
        %v445 = vlaneseq
        %v446 = vshrl.u32 %v445, 7
        %v447 = vsub.s32 4, %v446
        %v448 = vrot.slane %v416, %v447
        %450 = vbcast.lane.b32.xlu0 %v448, 256
        %v451 = vpop.permute.xlu0 %450
        %v452 = vlaneseq
        %v453 = vshrl.u32 %v452, 7
        %v454 = vsub.s32 5, %v453
        %v455 = vrot.slane %v416, %v454
        %457 = vbcast.lane.b32.xlu0 %v455, 256
        %v458 = vpop.permute.xlu0 %457
        %v459 = vlaneseq
        %v460 = vshrl.u32 %v459, 7
        %v461 = vsub.s32 6, %v460
        %v462 = vrot.slane %v416, %v461
        %464 = vbcast.lane.b32.xlu0 %v462, 256
        %v465 = vpop.permute.xlu0 %464
        %v466 = vlaneseq
        %v467 = vshrl.u32 %v466, 7
        %v468 = vsub.s32 7, %v467
        %v469 = vrot.slane %v416, %v468
        %471 = vbcast.lane.b32.xlu0 %v469, 256
        %v472 = vpop.permute.xlu0 %471
        %v473 = vmul.f32 %v423, %v279
        %v474 = vmul.f32 %v430, %v280
        %v475 = vmul.f32 %v437, %v281
        %v476 = vmul.f32 %v444, %v282
        %v477 = vmul.f32 %v451, %v283
        %v478 = vmul.f32 %v458, %v284
        %v479 = vmul.f32 %v465, %v285
        %v480 = vmul.f32 %v472, %v286
        %v481 = vsel %vm297, %v473, 0.0
        %v482 = vrot.slane %v481, 4
        %v483 = vadd.f32 %v481, %v482
        %v484 = vrot.slane %v483, 2
        %v485 = vadd.f32 %v483, %v484
        %v486 = vrot.slane %v485, 1
        %v487 = vadd.f32 %v485, %v486
        %v488 = vsel %vm297, %v474, 0.0
        %v489 = vrot.slane %v488, 4
        %v490 = vadd.f32 %v488, %v489
        %v491 = vrot.slane %v490, 2
        %v492 = vadd.f32 %v490, %v491
        %v493 = vrot.slane %v492, 1
        %v494 = vadd.f32 %v492, %v493
        %v495 = vsel %vm297, %v475, 0.0
        %v496 = vrot.slane %v495, 4
        %v497 = vadd.f32 %v495, %v496
        %v498 = vrot.slane %v497, 2
        %v499 = vadd.f32 %v497, %v498
        %v500 = vrot.slane %v499, 1
        %v501 = vadd.f32 %v499, %v500
        %v502 = vsel %vm297, %v476, 0.0
        %v503 = vrot.slane %v502, 4
        %v504 = vadd.f32 %v502, %v503
        %v505 = vrot.slane %v504, 2
        %v506 = vadd.f32 %v504, %v505
        %v507 = vrot.slane %v506, 1
        %v508 = vadd.f32 %v506, %v507
        %v509 = vsel %vm297, %v477, 0.0
        %v510 = vrot.slane %v509, 4
        %v511 = vadd.f32 %v509, %v510
        %v512 = vrot.slane %v511, 2
        %v513 = vadd.f32 %v511, %v512
        %v514 = vrot.slane %v513, 1
        %v515 = vadd.f32 %v513, %v514
        %v516 = vsel %vm297, %v478, 0.0
        %v517 = vrot.slane %v516, 4
        %v518 = vadd.f32 %v516, %v517
        %v519 = vrot.slane %v518, 2
        %v520 = vadd.f32 %v518, %v519
        %v521 = vrot.slane %v520, 1
        %v522 = vadd.f32 %v520, %v521
        %v523 = vsel %vm297, %v479, 0.0
        %v524 = vrot.slane %v523, 4
        %v525 = vadd.f32 %v523, %v524
        %v526 = vrot.slane %v525, 2
        %v527 = vadd.f32 %v525, %v526
        %v528 = vrot.slane %v527, 1
        %v529 = vadd.f32 %v527, %v528
        %v530 = vsel %vm297, %v480, 0.0
        %v531 = vrot.slane %v530, 4
        %v532 = vadd.f32 %v530, %v531
        %v533 = vrot.slane %v532, 2
        %v534 = vadd.f32 %v532, %v533
        %v535 = vrot.slane %v534, 1
        %v536 = vadd.f32 %v534, %v535
        %v538 = vrot.slane %v278, 1
        %v539 = vrot.slane %v278, 2
        %v540 = vrot.slane %v278, 3
        %v541 = vrot.slane %v278, 4
        %v542 = vrot.slane %v278, 5
        %v543 = vrot.slane %v278, 6
        %v544 = vrot.slane %v278, 7
        %v553 = vadd.f32 %v487, %v278
        %v554 = vadd.f32 %v494, %v538
        %v555 = vadd.f32 %v501, %v539
        %v556 = vadd.f32 %v508, %v540
        %v557 = vadd.f32 %v515, %v541
        %v558 = vadd.f32 %v522, %v542
        %v559 = vadd.f32 %v529, %v543
        %v560 = vadd.f32 %v536, %v544
        %vm561 = vcmp.gt.f32.partialorder %v553, 0.0
        %vm562 = vcmp.gt.f32.partialorder %v554, 0.0
        %vm563 = vcmp.gt.f32.partialorder %v555, 0.0
        %vm564 = vcmp.gt.f32.partialorder %v556, 0.0
        %vm565 = vcmp.gt.f32.partialorder %v557, 0.0
        %vm566 = vcmp.gt.f32.partialorder %v558, 0.0
        %vm567 = vcmp.gt.f32.partialorder %v559, 0.0
        %vm568 = vcmp.gt.f32.partialorder %v560, 0.0
        %v569 = vmin.f32 %v553, 0.0
        %v570 = vmin.f32 %v554, 0.0
        %v571 = vmin.f32 %v555, 0.0
        %v572 = vmin.f32 %v556, 0.0
        %v573 = vmin.f32 %v557, 0.0
        %v574 = vmin.f32 %v558, 0.0
        %v575 = vmin.f32 %v559, 0.0
        %v576 = vmin.f32 %v560, 0.0
        %v577 = vmul.f32 %v569, 1.442695
        %v578 = vpow.pop %v577
        %v579 = vmul.f32 %v570, 1.442695
        %v580 = vpow.pop %v579
        %v581 = vmul.f32 %v571, 1.442695
        %v582 = vpow.pop %v581
        %v583 = vmul.f32 %v572, 1.442695
        %v584 = vpow.pop %v583
        %v585 = vmul.f32 %v573, 1.442695
        %v586 = vpow.pop %v585
        %v587 = vmul.f32 %v574, 1.442695
        %v588 = vpow.pop %v587
        %v589 = vmul.f32 %v575, 1.442695
        %v590 = vpow.pop %v589
        %v591 = vmul.f32 %v576, 1.442695
        %v592 = vpow.pop %v591
        %v593 = vsub.f32 %v578, 1.0
        %v594 = vsub.f32 %v580, 1.0
        %v595 = vsub.f32 %v582, 1.0
        %v596 = vsub.f32 %v584, 1.0
        %v597 = vsub.f32 %v586, 1.0
        %v598 = vsub.f32 %v588, 1.0
        %v599 = vsub.f32 %v590, 1.0
        %v600 = vsub.f32 %v592, 1.0
        %v601 = vsel %vm561, %v553, %v593
        %v602 = vsel %vm562, %v554, %v594
        %v603 = vsel %vm563, %v555, %v595
        %v604 = vsel %vm564, %v556, %v596
        %v605 = vsel %vm565, %v557, %v597
        %v606 = vsel %vm566, %v558, %v598
        %v607 = vsel %vm567, %v559, %v599
        %v608 = vsel %vm568, %v560, %v600
        %v617 = vrot.slane %v602, 7
        %v618 = vsel %vm381, %v617, %v601
        %v619 = vrot.slane %v603, 6
        %v620 = vsel %vm383, %v619, %v618
        %v621 = vrot.slane %v604, 5
        %v622 = vsel %vm385, %v621, %v620
        %v623 = vrot.slane %v605, 4
        %v624 = vsel %vm387, %v623, %v622
        %v625 = vrot.slane %v606, 3
        %v626 = vsel %vm389, %v625, %v624
        %v627 = vrot.slane %v607, 2
        %v628 = vsel %vm391, %v627, %v626
        %v629 = vrot.slane %v608, 1
        %v630 = vsel %vm393, %v629, %v628
        %632 = vst.msk [vmem:[%s268] sm:$0xff] %vm297, %v630
        %s633 = sand.u32 %s150, 1
        %s634 = scalar_lea.sflag [#allocation4], %s633
        %s635 = sand.u32 %s150, 1
        %s636 = smul.addr %s635, 8
        %s637 = scalar_lea.vmem [#allocation5], %s636
        // Predicated region
        $region45: #{tpu_custom_call.1} parent=39 // pred_check
          %p638 = pneg %p160
        $region46: #{tpu_custom_call.1} parent=39 // pred_check_branch
          %640 = sbr.rel (%p638) target = $region48
        $region47: #{tpu_custom_call.1} parent=39 // pred_region
          %s642 = ssub.s32 128, 128
          %643 = vsyncadd %s634, %s642
          %s644 = smul.addr %s22, 128
          %s645 = scalar_lea.hbm %s5, %s644
          %s647 = sshll.u32 %s637, 4
          %s648 = int_to_ptr.vmem [resolvable:$true] %s647
          %650 = dma.vmem_to_hbm [thread:$0]  %s648, 128, %s645, %s634
        $region48: #{tpu_custom_call.1} parent=39 // pred_fallthru
          _
      $region40: #{tpu_custom_call.1} parent=5 // pred_fallthru
        _
      %p651 = scmp.le.s32.totalorder 2, %s17
      // Predicated region
      $region49: #{tpu_custom_call.1} parent=5 // pred_check
        %p652 = pneg %p651
      $region50: #{tpu_custom_call.1} parent=5 // pred_check_branch
        %654 = sbr.rel (%p652) target = $region52
      $region51: #{tpu_custom_call.1} parent=5 // pred_region
        %s655 = ssub.s32 %s17, 2
        // Predicated region
        $region53: #{tpu_custom_call.1} parent=51 // pred_check
          %p656 = pneg %p166
        $region54: #{tpu_custom_call.1} parent=51 // pred_check_branch
          %658 = sbr.rel (%p656) target = $region56
        $region55: #{tpu_custom_call.1} parent=51 // pred_region
          %s659 = sand.u32 %s151, 1
          %s660 = scalar_lea.sflag [#allocation4], %s659
          %s661 = sand.u32 %s151, 1
          %s662 = smul.addr %s661, 8
          %s663 = scalar_lea.vmem [#allocation5], %s662
          %664 = dma.done %s660, 128
        $region56: #{tpu_custom_call.1} parent=51 // pred_fallthru
          _
      $region52: #{tpu_custom_call.1} parent=5 // pred_fallthru
        _
    $region6: #{tpu_custom_call.1} parent=1 // loop_footer
      %s21 = sadd.s32 1, %s17
    $region7: #{tpu_custom_call.1} parent=1 // loop_footer_branch
      %16 = sbr.rel target = $region3
    $region8: #{tpu_custom_call.1} parent=1 // loop_exit
      _
    %665 = vsyncpa [#allocation3], 1
    %s666 = scalar_lea.sflag [#allocation3], 1
    %667 = vsyncpa %s666, 1
    %668 = vsyncpa [#allocation4], 1
    %s669 = scalar_lea.sflag [#allocation4], 1
    %670 = vsyncpa %s669, 1

</llo_original>
